<compile_context>
chip_gen: v7x
topology: tpu7x:2x2x1
jax: 0.10.0
libtpu: 0.0.40
codegen_flags: <defaults>
</compile_context>

<pallas_src>
import jax
import jax.numpy as jnp
from jax.experimental import pallas as pl
from jax.experimental.pallas import tpu as pltpu

B = 2          # batch
L_IN = 400     # input length
C_IN = 1
C_OUT = 12
KSIZE = 12
STRIDE = 5
PAD = 1
L_CONV = (L_IN + 2 * PAD - KSIZE) // STRIDE + 1   # 79 conv positions
J = L_CONV // 2                                   # 39 pooled positions (conv pos 78 dropped)
JP = 40                                           # J padded to a multiple of 8
R = B * JP                                        # 80 rows per even/odd half
FLAT = C_OUT * J                                  # 468 = fc1.in_features
N_CLS = 2
KAUG = KSIZE + 1                                  # 13 = 12 taps + constant-1 bias column

# Packed-constant slab layout (sublane-tile friendly offsets).
CONST_ROWS = 24
CONST_COLS = 128
WCT_ROW0, WCT_ROWS = 0, KAUG          # rows 0..12 : conv weight^T with bias row appended
SEL_ROW0 = 16                         # rows 16..17: 0/1 per-batch block-sum selector
BF_ROW0 = 23                          # row 23     : fc1 bias


def model2_kernel(p_ref, v_ref, const_ref, out_ref):
    # p_ref     : (2R, KAUG)   im2col patches + constant-1 column; rows = [even | odd],
    #                          row-within-half = b*JP + j
    # v_ref     : (2, R, C)    fc1 weight permuted to pooled layout, pad rows zeroed
    # const_ref : (24, 128)    packed constants (conv W^T+bias row, selector, fc1 bias)
    # out_ref   : (B, 2)
    wct = const_ref[WCT_ROW0:WCT_ROW0 + WCT_ROWS, 0:C_OUT]      # (13, 12)
    sel = const_ref[SEL_ROW0:SEL_ROW0 + B, 0:R]                 # (B, 80)
    bf = const_ref[BF_ROW0:BF_ROW0 + 1, 0:N_CLS]                # (1, 2)

    # --- Conv1d (+bias via the 1-column) as ONE MXU matmul over the 13-tap axis ---
    conv = jnp.dot(p_ref[...], wct, preferred_element_type=jnp.float32)   # (2R, C)
    even = conv[0:R, :]                                                    # conv pos t = 2j
    odd = conv[R:2 * R, :]                                                 # conv pos t = 2j+1

    # --- ReLU + MaxPool1d(2,2): relu(max(even, odd)), bias already folded (exact) ---
    pooled = jnp.maximum(jnp.maximum(even, odd), 0.0)                      # (R, C)

    # --- fc1: per-class multiply + lane reduce, then one (B,R)@(R,2) block-sum dot ---
    # (pad rows j=39 carry zero weight in v_ref, so they contribute nothing)
    t0 = jnp.sum(pooled * v_ref[0], axis=-1, keepdims=True)                # (R, 1)
    t1 = jnp.sum(pooled * v_ref[1], axis=-1, keepdims=True)                # (R, 1)
    t = jnp.concatenate([t0, t1], axis=1)                                  # (R, 2)
    out_ref[...] = jnp.dot(sel, t, preferred_element_type=jnp.float32) + bf


def pack_params(conv_w, conv_b, fc_w, fc_b):
    """Weight-only repacking.  Depends only on parameters: run ONCE and reuse."""
    # Conv weight transposed, with the bias appended as a 13th row (it pairs with the
    # constant-1 column in the patches so the bias rides the same MXU matmul).
    wct_b = jnp.concatenate(
        [jnp.transpose(conv_w[:, 0, :]), conv_b.reshape(1, C_OUT)], axis=0
    ).astype(jnp.float32)                                           # (13, 12)

    # fc1 weight permuted to pooled's (row = b*JP + j, lane = c) layout.
    # NOTE: the pad rows (j = 39) MUST stay exactly zero -- the padded patch rows
    # produce relu(bias) > 0 and the selector includes them, so any nonzero weight
    # in those rows would leak into the output.
    v = jnp.transpose(fc_w.reshape(N_CLS, C_OUT, J), (0, 2, 1))     # (2, J, C): v[o,j,c]=W[o,c*J+j]
    v = jnp.pad(v, ((0, 0), (0, JP - J), (0, 0)))                   # (2, JP, C), pad rows zeroed
    v = jnp.tile(v, (1, B, 1)).astype(jnp.float32)                  # (2, R, C)

    # 0/1 selector: sel[b, r] = 1 iff row r belongs to batch b's JP-row block.
    sel = (jnp.arange(B)[:, None] ==
           (jnp.arange(R)[None, :] // JP)).astype(jnp.float32)      # (B, R)

    const = jnp.zeros((CONST_ROWS, CONST_COLS), jnp.float32)
    const = const.at[WCT_ROW0:WCT_ROW0 + WCT_ROWS, 0:C_OUT].set(wct_b)
    const = const.at[SEL_ROW0:SEL_ROW0 + B, 0:R].set(sel)
    const = const.at[BF_ROW0:BF_ROW0 + 1, 0:N_CLS].set(
        fc_b.reshape(1, N_CLS).astype(jnp.float32))
    return v, const


def model2_forward(x, v, const):
    """x: (B, 1, L_IN) float32 (NCW, like PyTorch); v/const come from pack_params()."""
    xb = x[:, 0, :].astype(jnp.float32)
    x_pad = jnp.pad(xb, ((0, 0), (PAD, PAD)))                       # (B, 402)

    # im2col via static strided slices (no XLA gather): even conv position t=2j reads
    # x_pad[10j + k], odd position t=2j+1 reads x_pad[10j + 5 + k].
    span = (J - 1) * 2 * STRIDE + 1                                 # 381
    pe = jnp.stack(
        [x_pad[:, k:k + span:2 * STRIDE] for k in range(KSIZE)], axis=-1)            # (B, J, K)
    po = jnp.stack(
        [x_pad[:, k + STRIDE:k + STRIDE + span:2 * STRIDE] for k in range(KSIZE)],
        axis=-1)                                                                     # (B, J, K)
    pe = jnp.pad(pe, ((0, 0), (0, JP - J), (0, 0)))                 # (B, JP, K), pad row = 0
    po = jnp.pad(po, ((0, 0), (0, JP - J), (0, 0)))
    patches = jnp.concatenate(
        [pe.reshape(R, KSIZE), po.reshape(R, KSIZE)], axis=0)       # (2R, K)
    patches = jnp.concatenate(
        [patches, jnp.ones((2 * R, 1), jnp.float32)], axis=1)       # (2R, K+1): bias column

    vspec = pl.BlockSpec(memory_space=pltpu.MemorySpace.VMEM)
    cost = pl.CostEstimate(
        flops=2 * (2 * R) * KAUG * C_OUT      # conv GEMM
        + 2 * 2 * R * C_OUT                   # fc1 multiply + lane reduce (x2 classes)
        + 2 * B * R * N_CLS,                  # block-sum matmul
        transcendentals=0,
        bytes_accessed=4 * (2 * R * KAUG + 2 * R * C_OUT
                            + CONST_ROWS * CONST_COLS + B * N_CLS),
    )
    return pl.pallas_call(
        model2_kernel,
        out_shape=jax.ShapeDtypeStruct((B, N_CLS), jnp.float32),
        in_specs=[vspec] * 3,
        out_specs=vspec,
        cost_estimate=cost,
    )(patches, v, const)


def reference_forward(x, conv_w, conv_b, fc_w, fc_b):
    """Pure-JAX replica of the PyTorch forward, for validation."""
    y = jax.lax.conv_general_dilated(
        x, conv_w, window_strides=(STRIDE,), padding=[(PAD, PAD)],
        dimension_numbers=("NCH", "OIH", "NCH"))
    y = jax.nn.relu(y + conv_b[None, :, None])                      # (B, C, 79)
    y = jnp.maximum(y[:, :, 0:2 * J:2], y[:, :, 1:2 * J:2])         # MaxPool1d(2,2) -> (B, C, 39)
    flat = y.reshape(x.shape[0], FLAT)
    return flat @ fc_w.T + fc_b


if __name__ == "__main__":
    key = jax.random.PRNGKey(0)
    kx, k1, k2, k3, k4 = jax.random.split(key, 5)

    x = jax.random.normal(kx, (B, C_IN, L_IN), jnp.float32)

    # Deterministic parameter init (PyTorch-style uniform bounds; synthetic weights).
    b1 = 1.0 / (C_IN * KSIZE) ** 0.5
    conv_w = jax.random.uniform(k1, (C_OUT, C_IN, KSIZE), jnp.float32, -b1, b1)
    conv_b = jax.random.uniform(k2, (C_OUT,), jnp.float32, -b1, b1)
    b2 = 1.0 / FLAT ** 0.5
    fc_w = jax.random.uniform(k3, (N_CLS, FLAT), jnp.float32, -b2, b2)
    fc_b = jax.random.uniform(k4, (N_CLS,), jnp.float32, -b2, b2)

    # Weight repacking hoisted out of the per-call path: done once, reused.
    v, const = pack_params(conv_w, conv_b, fc_w, fc_b)
    fwd = jax.jit(model2_forward)

    out = jax.block_until_ready(fwd(x, v, const))

    ref = reference_forward(x, conv_w, conv_b, fc_w, fc_b)
    assert out.shape == (B, N_CLS), out.shape
    assert jnp.allclose(out, ref, atol=1e-4, rtol=1e-4), (out, ref)
    print("KERNEL_OK")
</pallas_src>

<mosaic_0001>
module attributes {stable_mosaic.version = 11 : i64} {
  func.func @model2_kernel(%arg0: memref<160x13xf32, #tpu.memory_space<vmem>>, %arg1: memref<2x80x12xf32, #tpu.memory_space<vmem>>, %arg2: memref<24x128xf32, #tpu.memory_space<vmem>>, %arg3: memref<2x2xf32, #tpu.memory_space<vmem>>) attributes {dimension_semantics = [], scalar_prefetch = 0 : i64, scratch_operands = 0 : i64, tpu.core_type = #tpu.core_type<tc>} {
    %c0 = arith.constant 0 : index
    %c0_0 = arith.constant 0 : index
    %0 = vector.load %arg2[%c0, %c0_0] : memref<24x128xf32, #tpu.memory_space<vmem>>, vector<13x12xf32>
    %c16 = arith.constant 16 : index
    %c0_1 = arith.constant 0 : index
    %1 = vector.load %arg2[%c16, %c0_1] : memref<24x128xf32, #tpu.memory_space<vmem>>, vector<2x80xf32>
    %c23 = arith.constant 23 : index
    %c0_2 = arith.constant 0 : index
    %2 = vector.load %arg2[%c23, %c0_2] : memref<24x128xf32, #tpu.memory_space<vmem>>, vector<1x2xf32>
    %c0_3 = arith.constant 0 : index
    %c0_4 = arith.constant 0 : index
    %3 = vector.load %arg0[%c0_3, %c0_4] : memref<160x13xf32, #tpu.memory_space<vmem>>, vector<160x13xf32>
    %cst = arith.constant dense<0.000000e+00> : vector<160x12xf32>
    %4 = tpu.matmul %3, %0, %cst {dimension_numbers = #tpu.dot_dimension_numbers<[1], [0], [0], [1], [0, 0, 1, 1], [], []>} : vector<160x13xf32>, vector<13x12xf32>, vector<160x12xf32> -> vector<160x12xf32>
    %5 = vector.extract_strided_slice %4 {offsets = [0, 0], sizes = [80, 12], strides = [1, 1]} : vector<160x12xf32> to vector<80x12xf32>
    %6 = vector.extract_strided_slice %4 {offsets = [80, 0], sizes = [80, 12], strides = [1, 1]} : vector<160x12xf32> to vector<80x12xf32>
    %7 = arith.maximumf %5, %6 : vector<80x12xf32>
    %cst_5 = arith.constant 0.000000e+00 : f32
    %8 = vector.broadcast %cst_5 : f32 to vector<80x12xf32>
    %9 = arith.maximumf %7, %8 : vector<80x12xf32>
    %c0_6 = arith.constant 0 : index
    %c0_7 = arith.constant 0 : index
    %c0_8 = arith.constant 0 : index
    %10 = vector.load %arg1[%c0_6, %c0_7, %c0_8] : memref<2x80x12xf32, #tpu.memory_space<vmem>>, vector<1x80x12xf32>
    %11 = vector.shape_cast %10 : vector<1x80x12xf32> to vector<80x12xf32>
    %12 = arith.mulf %9, %11 : vector<80x12xf32>
    %cst_9 = arith.constant dense<0.000000e+00> : vector<80xf32>
    %13 = vector.multi_reduction <add>, %12, %cst_9 [1] : vector<80x12xf32> to vector<80xf32>
    %14 = vector.shape_cast %13 : vector<80xf32> to vector<80x1xf32>
    %c1 = arith.constant 1 : index
    %c0_10 = arith.constant 0 : index
    %c0_11 = arith.constant 0 : index
    %15 = vector.load %arg1[%c1, %c0_10, %c0_11] : memref<2x80x12xf32, #tpu.memory_space<vmem>>, vector<1x80x12xf32>
    %16 = vector.shape_cast %15 : vector<1x80x12xf32> to vector<80x12xf32>
    %17 = arith.mulf %9, %16 : vector<80x12xf32>
    %cst_12 = arith.constant dense<0.000000e+00> : vector<80xf32>
    %18 = vector.multi_reduction <add>, %17, %cst_12 [1] : vector<80x12xf32> to vector<80xf32>
    %19 = vector.shape_cast %18 : vector<80xf32> to vector<80x1xf32>
    %20 = tpu.concatenate %14, %19 in 1 : vector<80x1xf32>, vector<80x1xf32> -> vector<80x2xf32>
    %cst_13 = arith.constant dense<0.000000e+00> : vector<2x2xf32>
    %21 = tpu.matmul %1, %20, %cst_13 {dimension_numbers = #tpu.dot_dimension_numbers<[1], [0], [0], [1], [0, 0, 1, 1], [], []>} : vector<2x80xf32>, vector<80x2xf32>, vector<2x2xf32> -> vector<2x2xf32>
    %22 = vector.broadcast %2 : vector<1x2xf32> to vector<2x2xf32>
    %23 = arith.addf %21, %22 : vector<2x2xf32>
    %c0_14 = arith.constant 0 : index
    %c0_15 = arith.constant 0 : index
    %24 = vector.load %arg3[%c0_14, %c0_15] : memref<2x2xf32, #tpu.memory_space<vmem>>, vector<2x2xf32>
    tpu.vector_store %arg3[%c0_14, %c0_15], %23 {strides = array<i32>} : memref<2x2xf32, #tpu.memory_space<vmem>>, vector<2x2xf32>,
    return
  }
}

</mosaic_0001>

<llo_original>
// kernel: model2_forward.1
$region0: #{model2_forward.1}
  #allocation0 [shape = 'u32[]', space=smem, size = 0x4, offset = 0x4, fixed_abs, tag = 'smem constant byte address 0x4 - core index']
  #allocation1 [shape = 'u32[144,128]{1,0:T(1,128)}', space=vmem, size = 0x12000, scoped, tag = 'internal scratch']
  %s0 = inlined_call_operand.vmem [shape: f32[160,13], index: 0, kind: input, shape index: {}]
  %s1 = inlined_call_operand.vmem [shape: f32[2,80,12], index: 1, kind: input, shape index: {}]
  %s2 = inlined_call_operand.vmem [shape: f32[24,128], index: 2, kind: input, shape index: {}]
  %s3 = inlined_call_operand.hbm [shape: f32[2,2], index: 3, kind: output, shape index: {}]
  %s4 = sld [smem:[#allocation0]]
  $region22: #{model2_forward.1} parent=0
    _
  %s6 = ssub.s32 1, %s4
  %s7 = scalar_select 0, %s6, %s4
  $region1: #{model2_forward.1} parent=0
    #allocation2 [shape = 'u8[1024]{0}', space=vmem, size = 0x400, scoped, tag = 'output window, operand 0, single buffered']
    #allocation3 [shape = 's32[1]{0}', space=sflag, size = 0x4, scoped, tag = 'scoped memory for model2_forward.1']
    %8 = vsyncpa [#allocation3], 0
    // Predicated region
    $region2: #{model2_forward.1} parent=1 // pred_check
      _
    $region3: #{model2_forward.1} parent=1 // pred_check_branch
      %10 = sbr.rel (0) target = $region5
    $region4: #{model2_forward.1} parent=1 // pred_region
      _
    $region5: #{model2_forward.1} parent=1 // pred_fallthru
      _
    // Predicated region
    $region6: #{model2_forward.1} parent=1 // pred_check
      _
    $region7: #{model2_forward.1} parent=1 // pred_check_branch
      %12 = sbr.rel (0) target = $region9
    $region8: #{model2_forward.1} parent=1 // pred_region
      _
    $region9: #{model2_forward.1} parent=1 // pred_fallthru
      _
    // Predicated region
    $region10: #{model2_forward.1} parent=1 // pred_check
      _
    $region11: #{model2_forward.1} parent=1 // pred_check_branch
      %14 = sbr.rel (0) target = $region13
    $region12: #{model2_forward.1} parent=1 // pred_region
      _
    $region13: #{model2_forward.1} parent=1 // pred_fallthru
      _
    %v15 = vld [vmem:[%s2] sm:$0xff]
    %v16 = vld [vmem:[%s2 + $0x8] sm:$0x1f]
    %v17 = vld [vmem:[%s2 + $0x10] sm:$0x3]
    %v18 = vld [vmem:[%s2 + $0x17] sm:$0x1]
    %v19 = vld [vmem:[%s0] sm:$0xff]
    %v20 = vld [vmem:[%s0 + $0x8] sm:$0xff]
    %v21 = vld [vmem:[%s0 + $0x10] sm:$0xff]
    %v22 = vld [vmem:[%s0 + $0x18] sm:$0xff]
    %v23 = vld [vmem:[%s0 + $0x20] sm:$0xff]
    %v24 = vld [vmem:[%s0 + $0x28] sm:$0xff]
    %v25 = vld [vmem:[%s0 + $0x30] sm:$0xff]
    %v26 = vld [vmem:[%s0 + $0x38] sm:$0xff]
    %v27 = vld [vmem:[%s0 + $0x40] sm:$0xff]
    %v28 = vld [vmem:[%s0 + $0x48] sm:$0xff]
    %v29 = vld [vmem:[%s0 + $0x50] sm:$0xff]
    %v30 = vld [vmem:[%s0 + $0x58] sm:$0xff]
    %v31 = vld [vmem:[%s0 + $0x60] sm:$0xff]
    %v32 = vld [vmem:[%s0 + $0x68] sm:$0xff]
    %v33 = vld [vmem:[%s0 + $0x70] sm:$0xff]
    %v34 = vld [vmem:[%s0 + $0x78] sm:$0xff]
    %v35 = vld [vmem:[%s0 + $0x80] sm:$0xff]
    %v36 = vld [vmem:[%s0 + $0x88] sm:$0xff]
    %v37 = vld [vmem:[%s0 + $0x90] sm:$0xff]
    %v38 = vld [vmem:[%s0 + $0x98] sm:$0xff]
    %vm39 = vcmask 105472
    %v41 = vsel %vm39, %v19, 0
    %v44 = vsel %vm39, %v20, 0
    %v47 = vsel %vm39, %v21, 0
    %v50 = vsel %vm39, %v22, 0
    %v53 = vsel %vm39, %v23, 0
    %v56 = vsel %vm39, %v24, 0
    %v59 = vsel %vm39, %v25, 0
    %v62 = vsel %vm39, %v26, 0
    %v65 = vsel %vm39, %v27, 0
    %v68 = vsel %vm39, %v28, 0
    %v71 = vsel %vm39, %v29, 0
    %v74 = vsel %vm39, %v30, 0
    %v77 = vsel %vm39, %v31, 0
    %v80 = vsel %vm39, %v32, 0
    %v83 = vsel %vm39, %v33, 0
    %v86 = vsel %vm39, %v34, 0
    %v89 = vsel %vm39, %v35, 0
    %v92 = vsel %vm39, %v36, 0
    %v95 = vsel %vm39, %v37, 0
    %v98 = vsel %vm39, %v38, 0
    %vm100 = vcmask 1044480
    %v102 = vsel %vm100, %v16, 0
    %104 = vmatprep.subr.mxu0 0.0
    %105 = vmatpush1.msra.mxu0 %v15
    %106 = vmatprep.subr.mxu0 0.0
    %107 = vmatpush1.msra.mxu0 %v102
    %108 = vmatprep.subr.mxu0 0.0
    %109 = vmatpush1.msra.mxu0 0.0
    %110 = vmatprep.subr.mxu0 0.0
    %111 = vmatpush1.msra.mxu0 0.0
    %112 = vmatprep.subr.mxu0 0.0
    %113 = vmatpush1.msra.mxu0 0.0
    %114 = vmatprep.subr.mxu0 0.0
    %115 = vmatpush1.msra.mxu0 0.0
    %116 = vmatprep.subr.mxu0 0.0
    %117 = vmatpush1.msra.mxu0 0.0
    %118 = vmatprep.subr.mxu0 0.0
    %119 = vmatpush1.msra.mxu0 0.0
    %120 = vmatprep.subr.mxu0 0.0
    %121 = vmatpush1.msra.mxu0 0.0
    %122 = vmatprep.subr.mxu0 0.0
    %123 = vmatpush1.msra.mxu0 0.0
    %124 = vmatprep.subr.mxu0 0.0
    %125 = vmatpush1.msra.mxu0 0.0
    %126 = vmatprep.subr.mxu0 0.0
    %127 = vmatpush1.msra.mxu0 0.0
    %128 = vmatprep.subr.mxu0 0.0
    %129 = vmatpush1.msra.mxu0 0.0
    %130 = vmatprep.subr.mxu0 0.0
    %131 = vmatpush1.msra.mxu0 0.0
    %132 = vmatprep.subr.mxu0 0.0
    %133 = vmatpush1.msra.mxu0 0.0
    %134 = vmatprep.subr.mxu0 0.0
    %135 = vmatpush1.msra.mxu0 0.0
    %136 = vmatprep.subr.mxu0 0.0
    %137 = vmatpush1.msra.mxu0 0.0
    %138 = vmatprep.subr.mxu0 0.0
    %139 = vmatpush1.msra.mxu0 0.0
    %140 = vmatprep.subr.mxu0 0.0
    %141 = vmatpush1.msra.mxu0 0.0
    %142 = vmatprep.subr.mxu0 0.0
    %143 = vmatpush1.msra.mxu0 0.0
    %144 = vmatprep.subr.mxu0 0.0
    %145 = vmatpush1.msra.mxu0 0.0
    %146 = vmatprep.subr.mxu0 0.0
    %147 = vmatpush1.msra.mxu0 0.0
    %148 = vmatprep.subr.mxu0 0.0
    %149 = vmatpush1.msra.mxu0 0.0
    %150 = vmatprep.subr.mxu0 0.0
    %151 = vmatpush1.msra.mxu0 0.0
    %152 = vmatprep.subr.mxu0 0.0
    %153 = vmatpush1.msra.mxu0 0.0
    %154 = vmatprep.subr.mxu0 0.0
    %155 = vmatpush1.msra.mxu0 0.0
    %156 = vmatprep.subr.mxu0 0.0
    %157 = vmatpush1.msra.mxu0 0.0
    %158 = vmatprep.subr.mxu0 0.0
    %159 = vmatpush1.msra.mxu0 0.0
    %160 = vmatprep.subr.mxu0 0.0
    %161 = vmatpush1.msra.mxu0 0.0
    %162 = vmatprep.subr.mxu0 0.0
    %163 = vmatpush1.msra.mxu0 0.0
    %164 = vmatprep.subr.mxu0 0.0
    %165 = vmatpush1.msra.mxu0 0.0
    %166 = vmatprep.subr.mxu0 0.0
    %167 = vmatpush1.msra.mxu0 0.0
    %168 = vmatprep.mubr.f32.mxu0 0.0
    %169 = vmatmul.mubr.f32.gmra.mrb[0].mxu0 %v41
    %v170 = vpop.f32.mrb[0].mxu0
    %v171 = vadd.f32 0.0, %v170
    %v172 = vpop.f32.mrb[0].mxu0
    %173 = vmatprep.mubr.f32.mxu0 0.0
    %174 = vmatmul.mubr.f32.gmra.mrb[0].mxu0 %v44
    %v175 = vpop.f32.mrb[0].mxu0
    %v176 = vadd.f32 0.0, %v175
    %v177 = vpop.f32.mrb[0].mxu0
    %178 = vmatprep.mubr.f32.mxu0 0.0
    %179 = vmatmul.mubr.f32.gmra.mrb[0].mxu0 %v47
    %v180 = vpop.f32.mrb[0].mxu0
    %v181 = vadd.f32 0.0, %v180
    %v182 = vpop.f32.mrb[0].mxu0
    %183 = vmatprep.mubr.f32.mxu0 0.0
    %184 = vmatmul.mubr.f32.gmra.mrb[0].mxu0 %v50
    %v185 = vpop.f32.mrb[0].mxu0
    %v186 = vadd.f32 0.0, %v185
    %v187 = vpop.f32.mrb[0].mxu0
    %188 = vmatprep.mubr.f32.mxu0 0.0
    %189 = vmatmul.mubr.f32.gmra.mrb[0].mxu0 %v53
    %v190 = vpop.f32.mrb[0].mxu0
    %v191 = vadd.f32 0.0, %v190
    %v192 = vpop.f32.mrb[0].mxu0
    %193 = vmatprep.mubr.f32.mxu0 0.0
    %194 = vmatmul.mubr.f32.gmra.mrb[0].mxu0 %v56
    %v195 = vpop.f32.mrb[0].mxu0
    %v196 = vadd.f32 0.0, %v195
    %v197 = vpop.f32.mrb[0].mxu0
    %198 = vmatprep.mubr.f32.mxu0 0.0
    %199 = vmatmul.mubr.f32.gmra.mrb[0].mxu0 %v59
    %v200 = vpop.f32.mrb[0].mxu0
    %v201 = vadd.f32 0.0, %v200
    %v202 = vpop.f32.mrb[0].mxu0
    %203 = vmatprep.mubr.f32.mxu0 0.0
    %204 = vmatmul.mubr.f32.gmra.mrb[0].mxu0 %v62
    %v205 = vpop.f32.mrb[0].mxu0
    %v206 = vadd.f32 0.0, %v205
    %v207 = vpop.f32.mrb[0].mxu0
    %208 = vmatprep.mubr.f32.mxu0 0.0
    %209 = vmatmul.mubr.f32.gmra.mrb[0].mxu0 %v65
    %v210 = vpop.f32.mrb[0].mxu0
    %v211 = vadd.f32 0.0, %v210
    %v212 = vpop.f32.mrb[0].mxu0
    %213 = vmatprep.mubr.f32.mxu0 0.0
    %214 = vmatmul.mubr.f32.gmra.mrb[0].mxu0 %v68
    %v215 = vpop.f32.mrb[0].mxu0
    %v216 = vadd.f32 0.0, %v215
    %v217 = vpop.f32.mrb[0].mxu0
    %218 = vmatprep.mubr.f32.mxu0 0.0
    %219 = vmatmul.mubr.f32.gmra.mrb[0].mxu0 %v71
    %v220 = vpop.f32.mrb[0].mxu0
    %v221 = vadd.f32 0.0, %v220
    %v222 = vpop.f32.mrb[0].mxu0
    %223 = vmatprep.mubr.f32.mxu0 0.0
    %224 = vmatmul.mubr.f32.gmra.mrb[0].mxu0 %v74
    %v225 = vpop.f32.mrb[0].mxu0
    %v226 = vadd.f32 0.0, %v225
    %v227 = vpop.f32.mrb[0].mxu0
    %228 = vmatprep.mubr.f32.mxu0 0.0
    %229 = vmatmul.mubr.f32.gmra.mrb[0].mxu0 %v77
    %v230 = vpop.f32.mrb[0].mxu0
    %v231 = vadd.f32 0.0, %v230
    %v232 = vpop.f32.mrb[0].mxu0
    %233 = vmatprep.mubr.f32.mxu0 0.0
    %234 = vmatmul.mubr.f32.gmra.mrb[0].mxu0 %v80
    %v235 = vpop.f32.mrb[0].mxu0
    %v236 = vadd.f32 0.0, %v235
    %v237 = vpop.f32.mrb[0].mxu0
    %238 = vmatprep.mubr.f32.mxu0 0.0
    %239 = vmatmul.mubr.f32.gmra.mrb[0].mxu0 %v83
    %v240 = vpop.f32.mrb[0].mxu0
    %v241 = vadd.f32 0.0, %v240
    %v242 = vpop.f32.mrb[0].mxu0
    %243 = vmatprep.mubr.f32.mxu0 0.0
    %244 = vmatmul.mubr.f32.gmra.mrb[0].mxu0 %v86
    %v245 = vpop.f32.mrb[0].mxu0
    %v246 = vadd.f32 0.0, %v245
    %v247 = vpop.f32.mrb[0].mxu0
    %248 = vmatprep.mubr.f32.mxu0 0.0
    %249 = vmatmul.mubr.f32.gmra.mrb[0].mxu0 %v89
    %v250 = vpop.f32.mrb[0].mxu0
    %v251 = vadd.f32 0.0, %v250
    %v252 = vpop.f32.mrb[0].mxu0
    %253 = vmatprep.mubr.f32.mxu0 0.0
    %254 = vmatmul.mubr.f32.gmra.mrb[0].mxu0 %v92
    %v255 = vpop.f32.mrb[0].mxu0
    %v256 = vadd.f32 0.0, %v255
    %v257 = vpop.f32.mrb[0].mxu0
    %258 = vmatprep.mubr.f32.mxu0 0.0
    %259 = vmatmul.mubr.f32.gmra.mrb[0].mxu0 %v95
    %v260 = vpop.f32.mrb[0].mxu0
    %v261 = vadd.f32 0.0, %v260
    %v262 = vpop.f32.mrb[0].mxu0
    %263 = vmatprep.mubr.f32.mxu0 0.0
    %264 = vmatmul.mubr.f32.gmra.mrb[0].mxu0 %v98
    %v265 = vpop.f32.mrb[0].mxu0
    %v266 = vadd.f32 0.0, %v265
    %v267 = vpop.f32.mrb[0].mxu0
    %268 = vdwg.mxu0
    %v269 = vmax.f32 %v171, %v221
    %v270 = vmax.f32 %v176, %v226
    %v271 = vmax.f32 %v181, %v231
    %v272 = vmax.f32 %v186, %v236
    %v273 = vmax.f32 %v191, %v241
    %v274 = vmax.f32 %v196, %v246
    %v275 = vmax.f32 %v201, %v251
    %v276 = vmax.f32 %v206, %v256
    %v277 = vmax.f32 %v211, %v261
    %v278 = vmax.f32 %v216, %v266
    %v279 = vmax.f32 %v269, 0.0
    %v280 = vmax.f32 %v270, 0.0
    %v281 = vmax.f32 %v271, 0.0
    %v282 = vmax.f32 %v272, 0.0
    %v283 = vmax.f32 %v273, 0.0
    %v284 = vmax.f32 %v274, 0.0
    %v285 = vmax.f32 %v275, 0.0
    %v286 = vmax.f32 %v276, 0.0
    %v287 = vmax.f32 %v277, 0.0
    %v288 = vmax.f32 %v278, 0.0
    %v289 = vld [vmem:[%s1] sm:$0xff]
    %v290 = vld [vmem:[%s1 + $0x8] sm:$0xff]
    %v291 = vld [vmem:[%s1 + $0x10] sm:$0xff]
    %v292 = vld [vmem:[%s1 + $0x18] sm:$0xff]
    %v293 = vld [vmem:[%s1 + $0x20] sm:$0xff]
    %v294 = vld [vmem:[%s1 + $0x28] sm:$0xff]
    %v295 = vld [vmem:[%s1 + $0x30] sm:$0xff]
    %v296 = vld [vmem:[%s1 + $0x38] sm:$0xff]
    %v297 = vld [vmem:[%s1 + $0x40] sm:$0xff]
    %v298 = vld [vmem:[%s1 + $0x48] sm:$0xff]
    %v299 = vmul.f32 %v279, %v289
    %v300 = vmul.f32 %v280, %v290
    %v301 = vmul.f32 %v281, %v291
    %v302 = vmul.f32 %v282, %v292
    %v303 = vmul.f32 %v283, %v293
    %v304 = vmul.f32 %v284, %v294
    %v305 = vmul.f32 %v285, %v295
    %v306 = vmul.f32 %v286, %v296
    %v307 = vmul.f32 %v287, %v297
    %v308 = vmul.f32 %v288, %v298
    %vm309 = vcmask 97280
    %v310 = vsel %vm309, %v299, 0.0
    %311 = vadd.xlane.f32.xlu0 %v310
    %v312 = vpop.xlane.xlu0 %311
    %v313 = vsel %vm309, %v300, 0.0
    %314 = vadd.xlane.f32.xlu0 %v313
    %v315 = vpop.xlane.xlu0 %314
    %v316 = vsel %vm309, %v301, 0.0
    %317 = vadd.xlane.f32.xlu0 %v316
    %v318 = vpop.xlane.xlu0 %317
    %v319 = vsel %vm309, %v302, 0.0
    %320 = vadd.xlane.f32.xlu0 %v319
    %v321 = vpop.xlane.xlu0 %320
    %v322 = vsel %vm309, %v303, 0.0
    %323 = vadd.xlane.f32.xlu0 %v322
    %v324 = vpop.xlane.xlu0 %323
    %v325 = vsel %vm309, %v304, 0.0
    %326 = vadd.xlane.f32.xlu0 %v325
    %v327 = vpop.xlane.xlu0 %326
    %v328 = vsel %vm309, %v305, 0.0
    %329 = vadd.xlane.f32.xlu0 %v328
    %v330 = vpop.xlane.xlu0 %329
    %v331 = vsel %vm309, %v306, 0.0
    %332 = vadd.xlane.f32.xlu0 %v331
    %v333 = vpop.xlane.xlu0 %332
    %v334 = vsel %vm309, %v307, 0.0
    %335 = vadd.xlane.f32.xlu0 %v334
    %v336 = vpop.xlane.xlu0 %335
    %v337 = vsel %vm309, %v308, 0.0
    %338 = vadd.xlane.f32.xlu0 %v337
    %v339 = vpop.xlane.xlu0 %338
    %s340 = scalar_lea.vmem %s1, 80
    %v341 = vld [vmem:[%s340] sm:$0xff]
    %v342 = vld [vmem:[%s340 + $0x8] sm:$0xff]
    %v343 = vld [vmem:[%s340 + $0x10] sm:$0xff]
    %v344 = vld [vmem:[%s340 + $0x18] sm:$0xff]
    %v345 = vld [vmem:[%s340 + $0x20] sm:$0xff]
    %v346 = vld [vmem:[%s340 + $0x28] sm:$0xff]
    %v347 = vld [vmem:[%s340 + $0x30] sm:$0xff]
    %v348 = vld [vmem:[%s340 + $0x38] sm:$0xff]
    %v349 = vld [vmem:[%s340 + $0x40] sm:$0xff]
    %v350 = vld [vmem:[%s340 + $0x48] sm:$0xff]
    %v351 = vmul.f32 %v279, %v341
    %v352 = vmul.f32 %v280, %v342
    %v353 = vmul.f32 %v281, %v343
    %v354 = vmul.f32 %v282, %v344
    %v355 = vmul.f32 %v283, %v345
    %v356 = vmul.f32 %v284, %v346
    %v357 = vmul.f32 %v285, %v347
    %v358 = vmul.f32 %v286, %v348
    %v359 = vmul.f32 %v287, %v349
    %v360 = vmul.f32 %v288, %v350
    %v361 = vsel %vm309, %v351, 0.0
    %362 = vadd.xlane.f32.xlu0 %v361
    %v363 = vpop.xlane.xlu0 %362
    %v364 = vsel %vm309, %v352, 0.0
    %365 = vadd.xlane.f32.xlu0 %v364
    %v366 = vpop.xlane.xlu0 %365
    %v367 = vsel %vm309, %v353, 0.0
    %368 = vadd.xlane.f32.xlu0 %v367
    %v369 = vpop.xlane.xlu0 %368
    %v370 = vsel %vm309, %v354, 0.0
    %371 = vadd.xlane.f32.xlu0 %v370
    %v372 = vpop.xlane.xlu0 %371
    %v373 = vsel %vm309, %v355, 0.0
    %374 = vadd.xlane.f32.xlu0 %v373
    %v375 = vpop.xlane.xlu0 %374
    %v376 = vsel %vm309, %v356, 0.0
    %377 = vadd.xlane.f32.xlu0 %v376
    %v378 = vpop.xlane.xlu0 %377
    %v379 = vsel %vm309, %v357, 0.0
    %380 = vadd.xlane.f32.xlu0 %v379
    %v381 = vpop.xlane.xlu0 %380
    %v382 = vsel %vm309, %v358, 0.0
    %383 = vadd.xlane.f32.xlu0 %v382
    %v384 = vpop.xlane.xlu0 %383
    %v385 = vsel %vm309, %v359, 0.0
    %386 = vadd.xlane.f32.xlu0 %v385
    %v387 = vpop.xlane.xlu0 %386
    %v388 = vsel %vm309, %v360, 0.0
    %389 = vadd.xlane.f32.xlu0 %v388
    %v390 = vpop.xlane.xlu0 %389
    %vm391 = vcmask 7168
    %v392 = vsel %vm391, %v312, %v363
    %v393 = vsel %vm391, %v315, %v366
    %v394 = vsel %vm391, %v318, %v369
    %v395 = vsel %vm391, %v321, %v372
    %v396 = vsel %vm391, %v324, %v375
    %v397 = vsel %vm391, %v327, %v378
    %v398 = vsel %vm391, %v330, %v381
    %v399 = vsel %vm391, %v333, %v384
    %v400 = vsel %vm391, %v336, %v387
    %v401 = vsel %vm391, %v339, %v390
    %v402 = vlaneseq
    %v403 = vshrl.u32 %v402, 7
    %v404 = vsub.s32 0, %v403
    %v405 = vrot.slane %v18, %v404
    %vm406 = vcmask 654336
    %v408 = vsel %vm406, %v17, 0
    %410 = vmatprep.subr.mxu0 0.0
    %411 = vmatpush1.msra.mxu0 %v392
    %412 = vmatprep.subr.mxu0 0.0
    %413 = vmatpush1.msra.mxu0 %v393
    %414 = vmatprep.subr.mxu0 0.0
    %415 = vmatpush1.msra.mxu0 %v394
    %416 = vmatprep.subr.mxu0 0.0
    %417 = vmatpush1.msra.mxu0 %v395
    %418 = vmatprep.subr.mxu0 0.0
    %419 = vmatpush1.msra.mxu0 %v396
    %420 = vmatprep.subr.mxu0 0.0
    %421 = vmatpush1.msra.mxu0 %v397
    %422 = vmatprep.subr.mxu0 0.0
    %423 = vmatpush1.msra.mxu0 %v398
    %424 = vmatprep.subr.mxu0 0.0
    %425 = vmatpush1.msra.mxu0 %v399
    %426 = vmatprep.subr.mxu0 0.0
    %427 = vmatpush1.msra.mxu0 %v400
    %428 = vmatprep.subr.mxu0 0.0
    %429 = vmatpush1.msra.mxu0 %v401
    %430 = vmatprep.subr.mxu0 0.0
    %431 = vmatpush1.msra.mxu0 0.0
    %432 = vmatprep.subr.mxu0 0.0
    %433 = vmatpush1.msra.mxu0 0.0
    %434 = vmatprep.subr.mxu0 0.0
    %435 = vmatpush1.msra.mxu0 0.0
    %436 = vmatprep.subr.mxu0 0.0
    %437 = vmatpush1.msra.mxu0 0.0
    %438 = vmatprep.subr.mxu0 0.0
    %439 = vmatpush1.msra.mxu0 0.0
    %440 = vmatprep.subr.mxu0 0.0
    %441 = vmatpush1.msra.mxu0 0.0
    %442 = vmatprep.subr.mxu0 0.0
    %443 = vmatpush1.msra.mxu0 0.0
    %444 = vmatprep.subr.mxu0 0.0
    %445 = vmatpush1.msra.mxu0 0.0
    %446 = vmatprep.subr.mxu0 0.0
    %447 = vmatpush1.msra.mxu0 0.0
    %448 = vmatprep.subr.mxu0 0.0
    %449 = vmatpush1.msra.mxu0 0.0
    %450 = vmatprep.subr.mxu0 0.0
    %451 = vmatpush1.msra.mxu0 0.0
    %452 = vmatprep.subr.mxu0 0.0
    %453 = vmatpush1.msra.mxu0 0.0
    %454 = vmatprep.subr.mxu0 0.0
    %455 = vmatpush1.msra.mxu0 0.0
    %456 = vmatprep.subr.mxu0 0.0
    %457 = vmatpush1.msra.mxu0 0.0
    %458 = vmatprep.subr.mxu0 0.0
    %459 = vmatpush1.msra.mxu0 0.0
    %460 = vmatprep.subr.mxu0 0.0
    %461 = vmatpush1.msra.mxu0 0.0
    %462 = vmatprep.subr.mxu0 0.0
    %463 = vmatpush1.msra.mxu0 0.0
    %464 = vmatprep.subr.mxu0 0.0
    %465 = vmatpush1.msra.mxu0 0.0
    %466 = vmatprep.subr.mxu0 0.0
    %467 = vmatpush1.msra.mxu0 0.0
    %468 = vmatprep.subr.mxu0 0.0
    %469 = vmatpush1.msra.mxu0 0.0
    %470 = vmatprep.subr.mxu0 0.0
    %471 = vmatpush1.msra.mxu0 0.0
    %472 = vmatprep.subr.mxu0 0.0
    %473 = vmatpush1.msra.mxu0 0.0
    %474 = vmatprep.mubr.f32.mxu0 0.0
    %475 = vmatmul.mubr.f32.gmra.mrb[0].mxu0 %v408
    %v476 = vpop.f32.mrb[0].mxu0
    %v477 = vadd.f32 %v405, %v476
    %v478 = vpop.f32.mrb[0].mxu0
    %479 = vdwg.mxu0
    %vm480 = vcmask 9216
    %481 = vst.msk [vmem:[#allocation2] sm:$0x3] %vm480, %v477
    // Predicated region
    $region14: #{model2_forward.1} parent=1 // pred_check
      _
    $region15: #{model2_forward.1} parent=1 // pred_check_branch
      %483 = sbr.rel (0) target = $region17
    $region16: #{model2_forward.1} parent=1 // pred_region
      %s485 = ssub.s32 32, 32
      %486 = vsyncadd [#allocation3], %s485
      %s488 = sshll.u32 [#allocation2], 4
      %s489 = int_to_ptr.vmem [resolvable:$true] %s488
      %491 = dma.vmem_to_hbm [thread:$0]  %s489, 32, %s3, [#allocation3]
    $region17: #{model2_forward.1} parent=1 // pred_fallthru
      _
    // Predicated region
    $region18: #{model2_forward.1} parent=1 // pred_check
      _
    $region19: #{model2_forward.1} parent=1 // pred_check_branch
      %493 = sbr.rel (0) target = $region21
    $region20: #{model2_forward.1} parent=1 // pred_region
      %494 = dma.done [#allocation3], 32
    $region21: #{model2_forward.1} parent=1 // pred_fallthru
      _
    %495 = vsyncpa [#allocation3], 1

</llo_original>
